<compile_context>
chip_gen: v7x
topology: tpu7x:2x2x1
jax: 0.10.0
libtpu: 0.0.40
codegen_flags: <defaults>
</compile_context>

<pallas_src>
import functools

import jax
import jax.numpy as jnp
from jax.experimental import pallas as pl
from jax.experimental.pallas import tpu as pltpu


def _contrastive_loss_kernel(a_ref, p_ref, n_ref, o_ref, acc_ref, *,
                             margin, batch, batch_block):
    """One batch tile: accumulate sum_i relu(||a-p||^2 - ||a-n||^2 + margin)."""
    i = pl.program_id(0)

    # Init the scalar accumulator on the first grid step.
    @pl.when(i == 0)
    def _():
        acc_ref[0] = jnp.float32(0.0)

    a = a_ref[...]            # (TB, D_pad) float32
    p = p_ref[...]
    n = n_ref[...]

    dp = a - p
    dn = a - n
    # part1 - part2 == sum(dp^2 - dn^2): fuse into a single cross-lane reduction.
    delta = jnp.sum(dp * dp - dn * dn, axis=-1, keepdims=True)     # (TB, 1)
    hinge = jnp.maximum(delta + margin, 0.0)                       # relu

    # Mask batch-padding rows (padded rows would otherwise contribute `margin`).
    row = jax.lax.broadcasted_iota(jnp.int32, hinge.shape, 0) + i * batch_block
    hinge = jnp.where(row < batch, hinge, 0.0)

    acc_ref[0] += jnp.sum(hinge)

    # Finalize: mean over the TRUE batch size, single scalar output.
    @pl.when(i == pl.num_programs(0) - 1)
    def _():
        o_ref[...] = jnp.full((1, 1), acc_ref[0] * (1.0 / batch), dtype=o_ref.dtype)


def contrastive_loss(anchor, pos, neg, *, margin=1.0, batch_block=None):
    B, D = anchor.shape
    assert pos.shape == (B, D) and neg.shape == (B, D)

    # Lane-dense feature dim: pad D to a multiple of 128 with zeros. Zeros are shared
    # by anchor/pos/neg, so they contribute nothing to the squared differences.
    D_pad = ((D + 127) // 128) * 128

    # Batch tile: multiple of 8 (sublane), capped so 3 inputs x 2 buffers stay tiny
    # in VMEM while still giving the pipeline big DMAs.
    if batch_block is None:
        batch_block = min(512, ((B + 7) // 8) * 8)
    batch_block = max(8, ((batch_block + 7) // 8) * 8)
    B_pad = ((B + batch_block - 1) // batch_block) * batch_block

    def _pad(v):
        return jnp.pad(v.astype(jnp.float32), ((0, B_pad - B), (0, D_pad - D)))

    a, p, n = _pad(anchor), _pad(pos), _pad(neg)

    kernel = functools.partial(
        _contrastive_loss_kernel,
        margin=float(margin),
        batch=int(B),
        batch_block=int(batch_block),
    )

    in_spec = pl.BlockSpec((batch_block, D_pad), lambda i: (i, 0))

    out = pl.pallas_call(
        kernel,
        out_shape=jax.ShapeDtypeStruct((1, 1), jnp.float32),
        grid=(B_pad // batch_block,),
        in_specs=[in_spec, in_spec, in_spec],
        # Output block index is constant across the grid -> resident accumulator,
        # written back once after the last step.
        out_specs=pl.BlockSpec((1, 1), lambda i: (0, 0)),
        scratch_shapes=[pltpu.SMEM((1,), jnp.float32)],
        compiler_params=pltpu.CompilerParams(
            dimension_semantics=("arbitrary",)),   # reduction axis
    )(a, p, n)

    return out[0, 0]


def _reference(anchor, pos, neg, margin=1.0):
    part1 = jnp.sum((anchor - pos) ** 2, axis=1)
    part2 = jnp.sum((anchor - neg) ** 2, axis=1)
    return jnp.mean(jax.nn.relu(part1 - part2 + margin))


if __name__ == "__main__":
    # Small, deterministic test. B=20, D=96 deliberately exercises both the
    # feature-dim padding (96 -> 128) and the batch padding/masking (20 -> 24),
    # with batch_block=8 giving a 3-step pipelined grid.
    B, D = 20, 96
    margin = 1.0

    key = jax.random.PRNGKey(0)
    ka, kp, kn = jax.random.split(key, 3)
    anchor = jax.random.normal(ka, (B, D), dtype=jnp.float32)
    pos = jax.random.normal(kp, (B, D), dtype=jnp.float32)
    neg = jax.random.normal(kn, (B, D), dtype=jnp.float32)

    loss = contrastive_loss(anchor, pos, neg, margin=margin, batch_block=8)
    loss = jax.block_until_ready(loss)

    ref = _reference(anchor, pos, neg, margin=margin)
    assert loss.shape == ()
    assert jnp.allclose(loss, ref, atol=1e-5, rtol=1e-5), (loss, ref)

    print("KERNEL_OK")
</pallas_src>

<mosaic_0001>
module attributes {stable_mosaic.version = 11 : i64} {
  func.func @_contrastive_loss_kernel(%arg0: i32, %arg1: memref<8x128xf32, #tpu.memory_space<vmem>>, %arg2: memref<8x128xf32, #tpu.memory_space<vmem>>, %arg3: memref<8x128xf32, #tpu.memory_space<vmem>>, %arg4: memref<1x1xf32, #tpu.memory_space<vmem>>, %arg5: memref<1xf32, #tpu.memory_space<smem>>) attributes {dimension_semantics = [#tpu.dimension_semantics<arbitrary>], iteration_bounds = array<i64: 3>, scalar_prefetch = 0 : i64, scratch_operands = 1 : i64, tpu.core_type = #tpu.core_type<tc>, window_params = [{transform_indices = @transform_0, window_bounds = array<i64: 8, 128>}, {transform_indices = @transform_1, window_bounds = array<i64: 8, 128>}, {transform_indices = @transform_2, window_bounds = array<i64: 8, 128>}, {pipeline_mode = #tpu.pipeline_mode<synchronous>, transform_indices = @transform_3, window_bounds = array<i64: 1, 1>}]} {
    %c0_i32 = arith.constant 0 : i32
    %0 = arith.cmpi eq, %arg0, %c0_i32 : i32
    %1 = arith.extui %0 : i1 to i32
    %c0_i32_0 = arith.constant 0 : i32
    %2 = arith.cmpi ne, %1, %c0_i32_0 : i32
    scf.if %2 {
      %cst_13 = arith.constant 0.000000e+00 : f32
      %c0_14 = arith.constant 0 : index
      %35 = memref.load %arg5[%c0_14] : memref<1xf32, #tpu.memory_space<smem>>
      memref.store %cst_13, %arg5[%c0_14] : memref<1xf32, #tpu.memory_space<smem>>
    } else {
    }
    %c0 = arith.constant 0 : index
    %c0_1 = arith.constant 0 : index
    %3 = vector.load %arg1[%c0, %c0_1] : memref<8x128xf32, #tpu.memory_space<vmem>>, vector<8x128xf32>
    %c0_2 = arith.constant 0 : index
    %c0_3 = arith.constant 0 : index
    %4 = vector.load %arg2[%c0_2, %c0_3] : memref<8x128xf32, #tpu.memory_space<vmem>>, vector<8x128xf32>
    %c0_4 = arith.constant 0 : index
    %c0_5 = arith.constant 0 : index
    %5 = vector.load %arg3[%c0_4, %c0_5] : memref<8x128xf32, #tpu.memory_space<vmem>>, vector<8x128xf32>
    %6 = arith.subf %3, %4 : vector<8x128xf32>
    %7 = arith.subf %3, %5 : vector<8x128xf32>
    %8 = arith.mulf %6, %6 : vector<8x128xf32>
    %9 = arith.mulf %7, %7 : vector<8x128xf32>
    %10 = arith.subf %8, %9 : vector<8x128xf32>
    %cst = arith.constant dense<0.000000e+00> : vector<8xf32>
    %11 = vector.multi_reduction <add>, %10, %cst [1] : vector<8x128xf32> to vector<8xf32>
    %12 = vector.shape_cast %11 : vector<8xf32> to vector<8x1xf32>
    %cst_6 = arith.constant 1.000000e+00 : f32
    %13 = vector.broadcast %cst_6 : f32 to vector<8x1xf32>
    %14 = arith.addf %12, %13 : vector<8x1xf32>
    %cst_7 = arith.constant 0.000000e+00 : f32
    %15 = vector.broadcast %cst_7 : f32 to vector<8x1xf32>
    %16 = arith.maximumf %14, %15 : vector<8x1xf32>
    %17 = tpu.iota {dimensions = array<i32: 0>} : vector<8x1xi32>
    %c8_i32 = arith.constant 8 : i32
    %18 = arith.muli %arg0, %c8_i32 : i32
    %19 = vector.broadcast %18 : i32 to vector<8x1xi32>
    %20 = arith.addi %17, %19 : vector<8x1xi32>
    %c20_i32 = arith.constant 20 : i32
    %21 = vector.broadcast %c20_i32 : i32 to vector<8x1xi32>
    %22 = arith.cmpi slt, %20, %21 : vector<8x1xi32>
    %cst_8 = arith.constant 0.000000e+00 : f32
    %23 = vector.broadcast %cst_8 : f32 to vector<8x1xf32>
    %24 = arith.select %22, %16, %23 : vector<8x1xi1>, vector<8x1xf32>
    %c0_9 = arith.constant 0 : index
    %25 = memref.load %arg5[%c0_9] : memref<1xf32, #tpu.memory_space<smem>>
    %26 = vector.shape_cast %24 : vector<8x1xf32> to vector<1x8x1xf32>
    %cst_10 = arith.constant dense<0.000000e+00> : vector<1xf32>
    %27 = vector.multi_reduction <add>, %26, %cst_10 [1, 2] : vector<1x8x1xf32> to vector<1xf32>
    %28 = vector.shape_cast %27 : vector<1xf32> to vector<1x1x1xf32>
    %29 = vector.extract %28[0, 0, 0] : f32 from vector<1x1x1xf32>
    %30 = arith.addf %25, %29 : f32
    %c0_11 = arith.constant 0 : index
    %31 = memref.load %arg5[%c0_11] : memref<1xf32, #tpu.memory_space<smem>>
    memref.store %30, %arg5[%c0_11] : memref<1xf32, #tpu.memory_space<smem>>
    %c2_i32 = arith.constant 2 : i32
    %32 = arith.cmpi eq, %arg0, %c2_i32 : i32
    %33 = arith.extui %32 : i1 to i32
    %c0_i32_12 = arith.constant 0 : i32
    %34 = arith.cmpi ne, %33, %c0_i32_12 : i32
    scf.if %34 {
      %c0_13 = arith.constant 0 : index
      %35 = memref.load %arg5[%c0_13] : memref<1xf32, #tpu.memory_space<smem>>
      %cst_14 = arith.constant 5.000000e-02 : f32
      %36 = arith.mulf %35, %cst_14 : f32
      %37 = vector.broadcast %36 : f32 to vector<1x1xf32>
      %c0_15 = arith.constant 0 : index
      %c0_16 = arith.constant 0 : index
      %38 = vector.load %arg4[%c0_15, %c0_16] : memref<1x1xf32, #tpu.memory_space<vmem>>, vector<1x1xf32>
      tpu.vector_store %arg4[%c0_15, %c0_16], %37 {strides = array<i32>} : memref<1x1xf32, #tpu.memory_space<vmem>>, vector<1x1xf32>,
    } else {
    }
    return
  }
  func.func @transform_0(%arg0: i32) -> (i32, i32) {
    %c0_i32 = arith.constant 0 : i32
    %c0_i32_0 = arith.constant 0 : i32
    return %arg0, %c0_i32 : i32, i32
  }
  func.func @transform_1(%arg0: i32) -> (i32, i32) {
    %c0_i32 = arith.constant 0 : i32
    %c0_i32_0 = arith.constant 0 : i32
    return %arg0, %c0_i32 : i32, i32
  }
  func.func @transform_2(%arg0: i32) -> (i32, i32) {
    %c0_i32 = arith.constant 0 : i32
    %c0_i32_0 = arith.constant 0 : i32
    return %arg0, %c0_i32 : i32, i32
  }
  func.func @transform_3(%arg0: i32) -> (i32, i32) {
    %c0_i32 = arith.constant 0 : i32
    %c0_i32_0 = arith.constant 0 : i32
    %c0_i32_1 = arith.constant 0 : i32
    return %c0_i32, %c0_i32_0 : i32, i32
  }
}

</mosaic_0001>

<llo_original>
// kernel: tpu_custom_call.1
$region0: #{tpu_custom_call.1}
  #allocation0 [shape = 'u32[]', space=smem, size = 0x4, offset = 0x4, fixed_abs, tag = 'smem constant byte address 0x4 - core index']
  #allocation1 [shape = 'u32[144,128]{1,0:T(1,128)}', space=vmem, size = 0x12000, scoped, tag = 'internal scratch']
  #allocation2 [shape = 'f32[1]{0:T(128)}', space=smem, size = 0x200, scoped, tag = 'scratch operand']
  %s0 = inlined_call_operand.hbm [shape: f32[24,128], index: 0, kind: input, shape index: {}]
  %s1 = inlined_call_operand.hbm [shape: f32[24,128], index: 1, kind: input, shape index: {}]
  %s2 = inlined_call_operand.hbm [shape: f32[24,128], index: 2, kind: input, shape index: {}]
  %s3 = inlined_call_operand.hbm [shape: f32[1,1], index: 3, kind: output, shape index: {}]
  %s4 = sld [smem:[#allocation0]]
  $region65: #{tpu_custom_call.1} parent=0
    _
  %s6 = ssub.s32 1, %s4
  %s7 = scalar_select 0, %s6, %s4
  $region1: #{tpu_custom_call.1} parent=0
    #allocation3 [shape = 'u8[8192]{0}', space=vmem, size = 0x2000, scoped, tag = 'input window, operand 0']
    #allocation4 [shape = 's32[2]{0}', space=sflag, size = 0x8, scoped, tag = 'scoped memory for tpu_custom_call.1']
    #allocation5 [shape = 's32[2]{0}', space=sflag, size = 0x8, scoped, tag = 'scoped memory for tpu_custom_call.1']
    #allocation6 [shape = 'u8[8192]{0}', space=vmem, size = 0x2000, scoped, tag = 'input window, operand 1']
    #allocation7 [shape = 's32[2]{0}', space=sflag, size = 0x8, scoped, tag = 'scoped memory for tpu_custom_call.1']
    #allocation8 [shape = 'u8[8192]{0}', space=vmem, size = 0x2000, scoped, tag = 'input window, operand 2']
    #allocation9 [shape = 'u8[512]{0}', space=vmem, size = 0x400, scoped, tag = 'output window, operand 0, single buffered']
    %8 = vsyncpa [#allocation4], 0
    %s9 = scalar_lea.sflag [#allocation4], 1
    %10 = vsyncpa %s9, 0
    %11 = vsyncpa [#allocation7], 0
    %s12 = scalar_lea.sflag [#allocation7], 1
    %13 = vsyncpa %s12, 0
    %14 = vsyncpa [#allocation5], 0
    loop: start=0, step=1, limit=5
    $region2: #{tpu_custom_call.1} parent=1 // loop_pre_header
      _
    $region3: #{tpu_custom_call.1} parent=1 // loop_header
      %s16 = sphi 0, %s20
      %p17 = scmp.ge.s32.totalorder %s16, 5
      %s26 = sphi 0, %s28
      %s29 = sphi 0, %s26
      %s30 = sphi 0, %s29
      %s46 = sphi 0, %s30
      %s52 = sphi 0, %s54
      %s55 = sphi 0, %s52
      %s56 = sphi 0, %s55
      %s72 = sphi 0, %s56
      %s78 = sphi 0, %s80
      %s81 = sphi 0, %s78
      %s82 = sphi 0, %s81
      %s98 = sphi 0, %s82
      %s102 = sphi 0, %s102
      %s104 = sphi 0, %s102
      %s105 = sphi 0, %s104
      %s119 = sphi 0, %s105
    $region4: #{tpu_custom_call.1} parent=1 // loop_header_branch
      %19 = sbr.rel (%p17) target = $region8
    $region5: #{tpu_custom_call.1} parent=1 // loop_body
      %s21 = ssub.s32 %s16, 1
      %s22 = ssub.s32 %s16, 2
      %s23 = sadd.s32 %s16, 1
      %s24 = ssub.s32 %s16, %s23
      %p25 = scmp.eq.s32.totalorder %s24, 0
      %s27 = sadd.s32 %s26, 1
      %s28 = scalar_select %p25, %s26, %s27
      %p31 = pneg %p25
      %p32 = scmp.eq.s32.totalorder %s16, 2
      %p33 = por %p31, %p32
      %p34 = scmp.ne.s32.totalorder %s26, %s29
      %p35 = scmp.eq.s32.totalorder %s16, 0
      %p36 = por %p34, %p35
      %p37 = scmp.ne.s32.totalorder %s26, %s29
      %p38 = scmp.eq.s32.totalorder %s21, 2
      %p39 = por %p37, %p38
      %p40 = scmp.ne.s32.totalorder %s29, %s30
      %p41 = scmp.eq.s32.totalorder %s21, 0
      %p42 = por %p40, %p41
      %p43 = scmp.ne.s32.totalorder %s29, %s30
      %p44 = scmp.eq.s32.totalorder %s22, 2
      %p45 = por %p43, %p44
      %p47 = scmp.ne.s32.totalorder %s30, %s46
      %p48 = scmp.eq.s32.totalorder %s22, 0
      %p49 = por %p47, %p48
      %s50 = ssub.s32 %s16, %s23
      %p51 = scmp.eq.s32.totalorder %s50, 0
      %s53 = sadd.s32 %s52, 1
      %s54 = scalar_select %p51, %s52, %s53
      %p57 = pneg %p51
      %p58 = scmp.eq.s32.totalorder %s16, 2
      %p59 = por %p57, %p58
      %p60 = scmp.ne.s32.totalorder %s52, %s55
      %p61 = scmp.eq.s32.totalorder %s16, 0
      %p62 = por %p60, %p61
      %p63 = scmp.ne.s32.totalorder %s52, %s55
      %p64 = scmp.eq.s32.totalorder %s21, 2
      %p65 = por %p63, %p64
      %p66 = scmp.ne.s32.totalorder %s55, %s56
      %p67 = scmp.eq.s32.totalorder %s21, 0
      %p68 = por %p66, %p67
      %p69 = scmp.ne.s32.totalorder %s55, %s56
      %p70 = scmp.eq.s32.totalorder %s22, 2
      %p71 = por %p69, %p70
      %p73 = scmp.ne.s32.totalorder %s56, %s72
      %p74 = scmp.eq.s32.totalorder %s22, 0
      %p75 = por %p73, %p74
      %s76 = ssub.s32 %s16, %s23
      %p77 = scmp.eq.s32.totalorder %s76, 0
      %s79 = sadd.s32 %s78, 1
      %s80 = scalar_select %p77, %s78, %s79
      %p83 = pneg %p77
      %p84 = scmp.eq.s32.totalorder %s16, 2
      %p85 = por %p83, %p84
      %p86 = scmp.ne.s32.totalorder %s78, %s81
      %p87 = scmp.eq.s32.totalorder %s16, 0
      %p88 = por %p86, %p87
      %p89 = scmp.ne.s32.totalorder %s78, %s81
      %p90 = scmp.eq.s32.totalorder %s21, 2
      %p91 = por %p89, %p90
      %p92 = scmp.ne.s32.totalorder %s81, %s82
      %p93 = scmp.eq.s32.totalorder %s21, 0
      %p94 = por %p92, %p93
      %p95 = scmp.ne.s32.totalorder %s81, %s82
      %p96 = scmp.eq.s32.totalorder %s22, 2
      %p97 = por %p95, %p96
      %p99 = scmp.ne.s32.totalorder %s82, %s98
      %p100 = scmp.eq.s32.totalorder %s22, 0
      %p101 = por %p99, %p100
      %s103 = sadd.s32 %s102, 1
      %p106 = scmp.eq.s32.totalorder %s16, 2
      %p107 = scmp.ne.s32.totalorder %s102, %s104
      %p108 = scmp.eq.s32.totalorder %s16, 0
      %p109 = por %p107, %p108
      %p110 = scmp.ne.s32.totalorder %s102, %s104
      %p111 = scmp.eq.s32.totalorder %s21, 2
      %p112 = por %p110, %p111
      %p113 = scmp.ne.s32.totalorder %s104, %s105
      %p114 = scmp.eq.s32.totalorder %s21, 0
      %p115 = por %p113, %p114
      %p116 = scmp.ne.s32.totalorder %s104, %s105
      %p117 = scmp.eq.s32.totalorder %s22, 2
      %p118 = por %p116, %p117
      %p120 = scmp.ne.s32.totalorder %s105, %s119
      %p121 = scmp.eq.s32.totalorder %s22, 0
      %p122 = por %p120, %p121
      %p123 = scmp.le.s32.totalorder 1, %s16
      %p124 = scmp.lt.s32.totalorder %s16, 4
      %p125 = pnand %p123, %p124
      %p126 = pneg %p125
      // Predicated region
      $region9: #{tpu_custom_call.1} parent=5 // pred_check
        _
      $region10: #{tpu_custom_call.1} parent=5 // pred_check_branch
        %128 = sbr.rel (%p125) target = $region12
      $region11: #{tpu_custom_call.1} parent=5 // pred_region
        %s129 = ssub.s32 %s16, 1
      $region12: #{tpu_custom_call.1} parent=5 // pred_fallthru
        _
      %p130 = scmp.lt.s32.totalorder %s16, 3
      // Predicated region
      $region13: #{tpu_custom_call.1} parent=5 // pred_check
        %p131 = pneg %p130
      $region14: #{tpu_custom_call.1} parent=5 // pred_check_branch
        %133 = sbr.rel (%p131) target = $region16
      $region15: #{tpu_custom_call.1} parent=5 // pred_region
        // Predicated region
        $region17: #{tpu_custom_call.1} parent=15 // pred_check
          %p134 = pneg %p36
        $region18: #{tpu_custom_call.1} parent=15 // pred_check_branch
          %136 = sbr.rel (%p134) target = $region20
        $region19: #{tpu_custom_call.1} parent=15 // pred_region
          %s137 = sand.u32 %s26, 1
          %s138 = scalar_lea.sflag [#allocation4], %s137
          %s139 = sand.u32 %s26, 1
          %s140 = smul.addr %s139, 8
          %s141 = scalar_lea.vmem [#allocation3], %s140
          %s143 = ssub.s32 128, 128
          %144 = vsyncadd %s138, %s143
          %s145 = smul.addr %s16, 128
          %s146 = scalar_lea.hbm %s0, %s145
          %s148 = sshll.u32 %s141, 4
          %s149 = int_to_ptr.vmem [resolvable:$true] %s148
          %151 = dma.hbm_to_vmem [thread:$0]  %s146, 128, %s149, %s138
        $region20: #{tpu_custom_call.1} parent=15 // pred_fallthru
          _
        // Predicated region
        $region21: #{tpu_custom_call.1} parent=15 // pred_check
          %p152 = pneg %p62
        $region22: #{tpu_custom_call.1} parent=15 // pred_check_branch
          %154 = sbr.rel (%p152) target = $region24
        $region23: #{tpu_custom_call.1} parent=15 // pred_region
          %s155 = sand.u32 %s16, 1
          %s156 = scalar_lea.sflag [#allocation7], %s155
          %s157 = sand.u32 %s52, 1
          %s158 = smul.addr %s157, 8
          %s159 = scalar_lea.vmem [#allocation6], %s158
          %s161 = ssub.s32 128, 128
          %162 = vsyncadd %s156, %s161
          %s163 = smul.addr %s16, 128
          %s164 = scalar_lea.hbm %s1, %s163
          %s166 = sshll.u32 %s159, 4
          %s167 = int_to_ptr.vmem [resolvable:$true] %s166
          %169 = dma.hbm_to_vmem [thread:$0]  %s164, 128, %s167, %s156
        $region24: #{tpu_custom_call.1} parent=15 // pred_fallthru
          _
        // Predicated region
        $region25: #{tpu_custom_call.1} parent=15 // pred_check
          %p170 = pneg %p88
        $region26: #{tpu_custom_call.1} parent=15 // pred_check_branch
          %172 = sbr.rel (%p170) target = $region28
        $region27: #{tpu_custom_call.1} parent=15 // pred_region
          %s173 = sand.u32 %s16, 1
          %s174 = scalar_lea.sflag [#allocation7], %s173
          %s175 = sand.u32 %s78, 1
          %s176 = smul.addr %s175, 8
          %s177 = scalar_lea.vmem [#allocation8], %s176
          %s179 = ssub.s32 128, 128
          %180 = vsyncadd %s174, %s179
          %s181 = smul.addr %s16, 128
          %s182 = scalar_lea.hbm %s2, %s181
          %s184 = sshll.u32 %s177, 4
          %s185 = int_to_ptr.vmem [resolvable:$true] %s184
          %187 = dma.hbm_to_vmem [thread:$0]  %s182, 128, %s185, %s174
        $region28: #{tpu_custom_call.1} parent=15 // pred_fallthru
          _
      $region16: #{tpu_custom_call.1} parent=5 // pred_fallthru
        _
      %p188 = scmp.le.s32.totalorder 1, %s16
      %p189 = scmp.lt.s32.totalorder %s16, 4
      %p190 = pnand %p188, %p189
      %p191 = pneg %p190
      // Predicated region
      $region29: #{tpu_custom_call.1} parent=5 // pred_check
        _
      $region30: #{tpu_custom_call.1} parent=5 // pred_check_branch
        %193 = sbr.rel (%p190) target = $region32
      $region31: #{tpu_custom_call.1} parent=5 // pred_region
        %s194 = ssub.s32 %s16, 1
        %s195 = sand.u32 %s29, 1
        %s196 = scalar_lea.sflag [#allocation4], %s195
        %s197 = sand.u32 %s29, 1
        %s198 = smul.addr %s197, 8
        %s199 = scalar_lea.vmem [#allocation3], %s198
        // Predicated region
        $region33: #{tpu_custom_call.1} parent=31 // pred_check
          %p200 = pneg %p42
        $region34: #{tpu_custom_call.1} parent=31 // pred_check_branch
          %202 = sbr.rel (%p200) target = $region36
        $region35: #{tpu_custom_call.1} parent=31 // pred_region
          %203 = dma.done %s196, 128
        $region36: #{tpu_custom_call.1} parent=31 // pred_fallthru
          _
        %s204 = sand.u32 %s21, 1
        %s205 = scalar_lea.sflag [#allocation7], %s204
        %s206 = sand.u32 %s55, 1
        %s207 = smul.addr %s206, 8
        %s208 = scalar_lea.vmem [#allocation6], %s207
        // Predicated region
        $region37: #{tpu_custom_call.1} parent=31 // pred_check
          %p209 = pneg %p68
        $region38: #{tpu_custom_call.1} parent=31 // pred_check_branch
          %211 = sbr.rel (%p209) target = $region40
        $region39: #{tpu_custom_call.1} parent=31 // pred_region
          %212 = dma.done %s205, 128
        $region40: #{tpu_custom_call.1} parent=31 // pred_fallthru
          _
        %s213 = sand.u32 %s21, 1
        %s214 = scalar_lea.sflag [#allocation7], %s213
        %s215 = sand.u32 %s81, 1
        %s216 = smul.addr %s215, 8
        %s217 = scalar_lea.vmem [#allocation8], %s216
        // Predicated region
        $region41: #{tpu_custom_call.1} parent=31 // pred_check
          %p218 = pneg %p94
        $region42: #{tpu_custom_call.1} parent=31 // pred_check_branch
          %220 = sbr.rel (%p218) target = $region44
        $region43: #{tpu_custom_call.1} parent=31 // pred_region
          %221 = dma.done %s214, 128
        $region44: #{tpu_custom_call.1} parent=31 // pred_fallthru
          _
        %s222 = sand.u32 %s29, 1
        %s223 = scalar_lea.sflag [#allocation4], %s222
        %s224 = sand.u32 %s29, 1
        %s225 = smul.addr %s224, 8
        %s226 = scalar_lea.vmem [#allocation3], %s225
        %p227 = pneg %p42
        %p228 = pneg %p39
        %s229 = sand.u32 %s21, 1
        %s230 = scalar_lea.sflag [#allocation7], %s229
        %s231 = sand.u32 %s55, 1
        %s232 = smul.addr %s231, 8
        %s233 = scalar_lea.vmem [#allocation6], %s232
        %p234 = pneg %p68
        %p235 = pneg %p65
        %s236 = sand.u32 %s21, 1
        %s237 = scalar_lea.sflag [#allocation7], %s236
        %s238 = sand.u32 %s81, 1
        %s239 = smul.addr %s238, 8
        %s240 = scalar_lea.vmem [#allocation8], %s239
        %p241 = pneg %p94
        %p242 = pneg %p91
        %p243 = pneg %p115
        %p244 = pneg %p112
        %p245 = scmp.eq.s32.totalorder %s21, 0
        // Predicated region
        $region45: #{tpu_custom_call.1} parent=31 // pred_check
          %p246 = pneg %p245
        $region46: #{tpu_custom_call.1} parent=31 // pred_check_branch
          %248 = sbr.rel (%p246) target = $region48
        $region47: #{tpu_custom_call.1} parent=31 // pred_region
          %s249 = scalar_lea.smem [#allocation2], 0
          %250 = sst [smem:[%s249]] 0.0
        $region48: #{tpu_custom_call.1} parent=31 // pred_fallthru
          _
        %v251 = vld [vmem:[%s199] sm:$0xff]
        %v252 = vld [vmem:[%s208] sm:$0xff]
        %v253 = vld [vmem:[%s217] sm:$0xff]
        %v254 = vsub.f32 %v251, %v252
        %v255 = vsub.f32 %v251, %v253
        %v256 = vmul.f32 %v254, %v254
        %v257 = vmul.f32 %v255, %v255
        %v258 = vsub.f32 %v256, %v257
        %259 = vadd.xlane.f32.xlu0 %v258
        %v260 = vpop.xlane.xlu0 %259
        %v261 = vadd.f32 %v260, 1.0
        %v262 = vmax.f32 %v261, 0.0
        %v263 = vlaneseq
        %v264 = vshrl.u32 %v263, 7
        %s265 = smul.u32 %s21, 8
        %v266 = vstv %s265
        %v267 = vadd.s32 %v264, %v266
        %vm268 = vcmp.lt.s32.totalorder %v267, 20
        %v269 = vsel %vm268, %v262, 0.0
        %s270 = sld [smem:[#allocation2]]
        %vm271 = vcmask 7168
        %v272 = vsel %vm271, %v269, 0.0
        %273 = vadd.xlane.f32.xlu0 %v272
        %v274 = vpop.xlane.xlu0 %273
        %v275 = vrot.slane %v274, 4
        %v276 = vadd.f32 %v274, %v275
        %v277 = vrot.slane %v276, 2
        %v278 = vadd.f32 %v276, %v277
        %v279 = vrot.slane %v278, 1
        %v280 = vadd.f32 %v278, %v279
        %s281 = vtos %v280
        %s282 = sadd.f32 %s270, %s281
        %s283 = scalar_lea.smem [#allocation2], 0
        %284 = sst [smem:[%s283]] %s282
        %p285 = scmp.eq.s32.totalorder %s21, 2
        // Predicated region
        $region49: #{tpu_custom_call.1} parent=31 // pred_check
          %p286 = pneg %p285
        $region50: #{tpu_custom_call.1} parent=31 // pred_check_branch
          %288 = sbr.rel (%p286) target = $region52
        $region51: #{tpu_custom_call.1} parent=31 // pred_region
          %s289 = sld [smem:[#allocation2]]
          %s290 = smul.f32 %s289, 0.05
          %v291 = vstv %s290
          %vm292 = vcmask 0
          %293 = vst.msk [vmem:[#allocation9] sm:$0x1] %vm292, %v291
        $region52: #{tpu_custom_call.1} parent=31 // pred_fallthru
          _
        // Predicated region
        $region53: #{tpu_custom_call.1} parent=31 // pred_check
          %p294 = pneg %p112
        $region54: #{tpu_custom_call.1} parent=31 // pred_check_branch
          %296 = sbr.rel (%p294) target = $region56
        $region55: #{tpu_custom_call.1} parent=31 // pred_region
          %s298 = ssub.s32 16, 16
          %299 = vsyncadd [#allocation5], %s298
          %s301 = sshll.u32 [#allocation9], 4
          %s302 = int_to_ptr.vmem [resolvable:$true] %s301
          %304 = dma.vmem_to_hbm [thread:$0]  %s302, 16, %s3, [#allocation5]
        $region56: #{tpu_custom_call.1} parent=31 // pred_fallthru
          _
        // Predicated region
        $region57: #{tpu_custom_call.1} parent=31 // pred_check
          %p305 = pneg %p112
        $region58: #{tpu_custom_call.1} parent=31 // pred_check_branch
          %307 = sbr.rel (%p305) target = $region60
        $region59: #{tpu_custom_call.1} parent=31 // pred_region
          %308 = dma.done [#allocation5], 16
        $region60: #{tpu_custom_call.1} parent=31 // pred_fallthru
          _
      $region32: #{tpu_custom_call.1} parent=5 // pred_fallthru
        _
      %p309 = scmp.le.s32.totalorder 2, %s16
      // Predicated region
      $region61: #{tpu_custom_call.1} parent=5 // pred_check
        %p310 = pneg %p309
      $region62: #{tpu_custom_call.1} parent=5 // pred_check_branch
        %312 = sbr.rel (%p310) target = $region64
      $region63: #{tpu_custom_call.1} parent=5 // pred_region
        %s313 = ssub.s32 %s16, 2
      $region64: #{tpu_custom_call.1} parent=5 // pred_fallthru
        _
    $region6: #{tpu_custom_call.1} parent=1 // loop_footer
      %s20 = sadd.s32 1, %s16
    $region7: #{tpu_custom_call.1} parent=1 // loop_footer_branch
      %15 = sbr.rel target = $region3
    $region8: #{tpu_custom_call.1} parent=1 // loop_exit
      _
    %314 = vsyncpa [#allocation4], 1
    %s315 = scalar_lea.sflag [#allocation4], 1
    %316 = vsyncpa %s315, 1
    %317 = vsyncpa [#allocation7], 1
    %s318 = scalar_lea.sflag [#allocation7], 1
    %319 = vsyncpa %s318, 1
    %320 = vsyncpa [#allocation5], 1
    %s321 = scalar_lea.sflag [#allocation5], 1
    %322 = vsyncpa %s321, 1

</llo_original>
